<compile_context>
chip_gen: v6e
topology: v6e:2x2x1
jax: 0.10.0
libtpu: 0.0.40
codegen_flags: <defaults>
</compile_context>

<pallas_src>
import functools
import math

import jax
import jax.numpy as jnp
from jax.experimental import pallas as pl
from jax.experimental.pallas import tpu as pltpu

MAX_LOGSTD = 10.0
BN_EPS = 1e-5
LANE = 128


# ----------------------------------------------------------------------------
# Fused kernel: both encoders + clamp + reparametrize + inner-product decoder.
# ----------------------------------------------------------------------------
def _fused_vgae_kernel(a_ref, x_ref, ei_ref, noise_ref,
                       w1_ref, b1_ref, g1_ref, be1_ref,
                       w2_ref, b2_ref, g2_ref, be2_ref,
                       w3_ref, b3_ref,
                       dec_ref, z_ref, logstd_ref,
                       *, latent_dim):
    A = a_ref[...]                                   # (N, N) bf16, GCN-normalized
    n = A.shape[0]

    def gcn(h, w, b):
        # h' = A_hat @ (h @ W) + b ; bf16 operands on the A matmul, f32 accumulation.
        hw = jnp.dot(h, w, preferred_element_type=jnp.float32)
        ahw = jnp.dot(A, hw.astype(A.dtype), preferred_element_type=jnp.float32)
        return ahw + b

    def bn(h, gamma, beta):
        # BatchNorm1d (training): batch stats over the node axis, biased variance.
        m = jnp.mean(h, axis=0, keepdims=True)
        d = h - m
        v = jnp.mean(d * d, axis=0, keepdims=True)
        return d * jax.lax.rsqrt(v + BN_EPS) * gamma + beta

    def dual_norm_act(h, gamma, beta):
        # columns [0, W/2)  -> encoder_mu branch : BatchNorm then ReLU
        # columns [W/2, W)  -> encoder_log branch: ReLU then BatchNorm
        half = h.shape[1] // 2
        is_mu = jax.lax.broadcasted_iota(jnp.int32, h.shape, 1) < half
        bn_relu = jnp.maximum(bn(h, gamma, beta), 0.0)
        relu_bn = bn(jnp.maximum(h, 0.0), gamma, beta)
        return jnp.where(is_mu, bn_relu, relu_bn)

    h = gcn(x_ref[...], w1_ref[...], b1_ref[...])
    h = dual_norm_act(h, g1_ref[...], be1_ref[...])
    h = gcn(h, w2_ref[...], b2_ref[...])
    h = dual_norm_act(h, g2_ref[...], be2_ref[...])
    out = gcn(h, w3_ref[...], b3_ref[...])           # (N, 2*latent) = [mu | logstd]

    mu = out[:, :latent_dim]
    logstd = jnp.minimum(out[:, latent_dim:], MAX_LOGSTD)   # clamp(max=MAX_LOGSTD)
    z = mu + noise_ref[...] * jnp.exp(logstd)               # reparametrize (training)
    z_ref[...] = z
    logstd_ref[...] = logstd

    # Inner-product decoder: selectors built in-register from int32 edge indices
    # (no E x N f32 one-hot matrices streamed from HBM).
    ei = ei_ref[...]                                        # (2, E_pad) int32
    e_pad = ei.shape[1]
    node_iota = jax.lax.broadcasted_iota(jnp.int32, (n, e_pad), 0)
    oh_src = (node_iota == ei[0:1, :]).astype(jnp.float32)  # (N, E_pad)
    oh_dst = (node_iota == ei[1:2, :]).astype(jnp.float32)  # (N, E_pad)
    # gram = z @ z.T ; dec[e] = gram[src_e, dst_e]
    gram = jax.lax.dot_general(z, z, (((1,), (1,)), ((), ())),
                               preferred_element_type=jnp.float32)    # (N, N)
    gdst = jnp.dot(gram, oh_dst, preferred_element_type=jnp.float32)  # (N, E_pad)
    val = jnp.sum(oh_src * gdst, axis=0, keepdims=True)               # (1, E_pad) lane-dense
    dec_ref[...] = jax.nn.sigmoid(val)


# ----------------------------------------------------------------------------
# Host-side helpers: adjacency normalization, parameters, parameter packing.
# ----------------------------------------------------------------------------
def dense_gcn_norm(edge_index, num_nodes):
    """Dense A_hat = D^-1/2 (A + I) D^-1/2, matching PyG gcn_norm(add_self_loops=True).
    Scatter-ADD so duplicate edges accumulate exactly like PyG."""
    A = jnp.zeros((num_nodes, num_nodes), jnp.float32)
    A = A.at[edge_index[1], edge_index[0]].add(1.0)   # edge src -> dst aggregates at dst row
    A = A + jnp.eye(num_nodes, dtype=jnp.float32)     # self loops
    deg = jnp.sum(A, axis=1)                          # degree incl. self loop (>= 1)
    dinv = jax.lax.rsqrt(deg)
    return A * dinv[:, None] * dinv[None, :]


def init_encoder_params(key, dims):
    """One encoder stack; dims = [input_dim, hidden1, hidden2, latent_dim]."""
    ks = jax.random.split(key, 3)
    p = {}
    for i, (fin, fout) in enumerate(zip(dims[:-1], dims[1:]), start=1):
        scale = jnp.sqrt(2.0 / (fin + fout)).astype(jnp.float32)
        p[f"w{i}"] = jax.random.normal(ks[i - 1], (fin, fout), jnp.float32) * scale
        p[f"b{i}"] = jnp.zeros((1, fout), jnp.float32)           # GCNConv bias init = 0
        if i < 3:                                                # BN after first two layers
            p[f"g{i}"] = jnp.ones((1, fout), jnp.float32)        # gamma
            p[f"be{i}"] = jnp.zeros((1, fout), jnp.float32)      # beta
    return p


def _block_diag(a, b):
    r1, c1 = a.shape
    r2, c2 = b.shape
    top = jnp.concatenate([a, jnp.zeros((r1, c2), a.dtype)], axis=1)
    bot = jnp.concatenate([jnp.zeros((r2, c1), b.dtype), b], axis=1)
    return jnp.concatenate([top, bot], axis=0)


def fuse_encoder_params(mu_p, log_p):
    """Pack encoder_mu and encoder_log so each layer is one matmul over a concatenated
    feature axis: layer 1 shares its input x -> [W1_mu | W1_log]; layers 2/3 have
    branch-specific hidden states -> block-diagonal weights."""
    f = {
        "w1": jnp.concatenate([mu_p["w1"], log_p["w1"]], axis=1),
        "w2": _block_diag(mu_p["w2"], log_p["w2"]),
        "w3": _block_diag(mu_p["w3"], log_p["w3"]),
    }
    for i in (1, 2, 3):
        f[f"b{i}"] = jnp.concatenate([mu_p[f"b{i}"], log_p[f"b{i}"]], axis=1)
    for i in (1, 2):
        f[f"g{i}"] = jnp.concatenate([mu_p[f"g{i}"], log_p[f"g{i}"]], axis=1)
        f[f"be{i}"] = jnp.concatenate([mu_p[f"be{i}"], log_p[f"be{i}"]], axis=1)
    return f


# ----------------------------------------------------------------------------
# Forward: one pallas_call for the whole VGAE forward.
# ----------------------------------------------------------------------------
@functools.partial(jax.jit, static_argnames=("latent_dim",))
def graph_vae_v3_forward(x, edge_index, fused_params, noise, *, latent_dim):
    n = x.shape[0]
    e = edge_index.shape[1]
    e_pad = max(LANE, ((e + LANE - 1) // LANE) * LANE)

    a_hat = dense_gcn_norm(edge_index, n).astype(jnp.bfloat16)        # bf16 adjacency
    ei_pad = jnp.zeros((2, e_pad), jnp.int32).at[:, :e].set(edge_index.astype(jnp.int32))

    fp = fused_params
    args = (a_hat, x, ei_pad, noise,
            fp["w1"], fp["b1"], fp["g1"], fp["be1"],
            fp["w2"], fp["b2"], fp["g2"], fp["be2"],
            fp["w3"], fp["b3"])

    out_shapes = (
        jax.ShapeDtypeStruct((1, e_pad), jnp.float32),       # dec (lane-dense slab)
        jax.ShapeDtypeStruct((n, latent_dim), jnp.float32),  # z
        jax.ShapeDtypeStruct((n, latent_dim), jnp.float32),  # logstd (clamped)
    )

    # Explicit VMEM budget sized from the actual buffers (with headroom), capped so it
    # is valid on every generation's scoped limit.
    total_bytes = sum(int(a.size) * a.dtype.itemsize for a in args)
    total_bytes += sum(math.prod(s.shape) * jnp.dtype(s.dtype).itemsize for s in out_shapes)
    vmem_limit = int(min(32 * 1024 * 1024, max(4 * 1024 * 1024, 4 * total_bytes)))

    dec_pad, z, logstd = pl.pallas_call(
        functools.partial(_fused_vgae_kernel, latent_dim=latent_dim),
        out_shape=out_shapes,
        in_specs=[pl.BlockSpec(memory_space=pltpu.MemorySpace.VMEM)] * len(args),
        out_specs=tuple(pl.BlockSpec(memory_space=pltpu.MemorySpace.VMEM)
                        for _ in out_shapes),
        compiler_params=pltpu.CompilerParams(vmem_limit_bytes=vmem_limit),
    )(*args)

    dec = dec_pad[0, :e]
    # matches torch forward: (self.gae.decode(z, edge_index), z, self.gae.__logstd__)
    return dec, z, logstd


if __name__ == "__main__":
    # Small shapes consistent with the module: input_dim=4, capacity=2 -> hidden 8/16, latent=8.
    N, INPUT_DIM, CAPACITY, LATENT_DIM = 16, 4, 2, 8
    H1, H2 = INPUT_DIM * CAPACITY, INPUT_DIM * CAPACITY * 2

    key = jax.random.PRNGKey(0)
    k_x, k_mu, k_log, k_noise = jax.random.split(key, 4)

    # Node features [N, input_dim]
    x = jax.random.normal(k_x, (N, INPUT_DIM), jnp.float32)

    # Bidirectional ring graph: edge_index [2, E], E = 2N
    src = jnp.arange(N, dtype=jnp.int32)
    dst = (src + 1) % N
    edge_index = jnp.concatenate(
        [jnp.stack([src, dst], axis=0), jnp.stack([dst, src], axis=0)], axis=1)

    dims = [INPUT_DIM, H1, H2, LATENT_DIM]
    mu_params = init_encoder_params(k_mu, dims)
    log_params = init_encoder_params(k_log, dims)
    fused = fuse_encoder_params(mu_params, log_params)

    # Deterministic reparametrization noise (torch uses randn_like; training=True).
    noise = jax.random.normal(k_noise, (N, LATENT_DIM), jnp.float32)

    dec, z, logstd = graph_vae_v3_forward(x, edge_index, fused, noise,
                                          latent_dim=LATENT_DIM)
    jax.block_until_ready((dec, z, logstd))

    assert dec.shape == (edge_index.shape[1],)
    assert z.shape == (N, LATENT_DIM)
    assert logstd.shape == (N, LATENT_DIM)
    assert bool(jnp.all(jnp.isfinite(dec)))
    assert bool(jnp.all(jnp.isfinite(z)))
    assert bool(jnp.all(jnp.isfinite(logstd)))
    print("KERNEL_OK")
</pallas_src>

<mosaic_0001>
module attributes {stable_mosaic.version = 11 : i64} {
  func.func private @main(%arg0: i32) attributes {dimension_semantics = [#tpu.dimension_semantics<core_parallel>], iteration_bounds = array<i64: 2>, tpu.core_type = #tpu.core_type<sc_scalar_subcore>, window_params = []} {
    return
  }
}

module attributes {stable_mosaic.version = 11 : i64} {
  func.func private @main(%arg0: i32) attributes {dimension_semantics = [#tpu.dimension_semantics<core_parallel>], iteration_bounds = array<i64: 2>, tpu.core_type = #tpu.core_type<sc_scalar_subcore>, window_params = []} {
    return
  }
}

module attributes {stable_mosaic.version = 11 : i64} {
  func.func @_fused_vgae_kernel(%arg0: memref<16x16xbf16, #tpu.memory_space<vmem>>, %arg1: memref<16x4xf32, #tpu.memory_space<vmem>>, %arg2: memref<2x128xi32, #tpu.memory_space<vmem>>, %arg3: memref<16x8xf32, #tpu.memory_space<vmem>>, %arg4: memref<4x16xf32, #tpu.memory_space<vmem>>, %arg5: memref<1x16xf32, #tpu.memory_space<vmem>>, %arg6: memref<1x16xf32, #tpu.memory_space<vmem>>, %arg7: memref<1x16xf32, #tpu.memory_space<vmem>>, %arg8: memref<16x32xf32, #tpu.memory_space<vmem>>, %arg9: memref<1x32xf32, #tpu.memory_space<vmem>>, %arg10: memref<1x32xf32, #tpu.memory_space<vmem>>, %arg11: memref<1x32xf32, #tpu.memory_space<vmem>>, %arg12: memref<32x16xf32, #tpu.memory_space<vmem>>, %arg13: memref<1x16xf32, #tpu.memory_space<vmem>>, %arg14: memref<1x128xf32, #tpu.memory_space<vmem>>, %arg15: memref<16x8xf32, #tpu.memory_space<vmem>>, %arg16: memref<16x8xf32, #tpu.memory_space<vmem>>) attributes {dimension_semantics = [], scalar_prefetch = 0 : i64, scratch_operands = 0 : i64, tpu.core_type = #tpu.core_type<tc>} {
    %c0 = arith.constant 0 : index
    %c0_0 = arith.constant 0 : index
    %0 = vector.load %arg0[%c0, %c0_0] : memref<16x16xbf16, #tpu.memory_space<vmem>>, vector<16x16xbf16>
    %c0_1 = arith.constant 0 : index
    %c0_2 = arith.constant 0 : index
    %1 = vector.load %arg1[%c0_1, %c0_2] : memref<16x4xf32, #tpu.memory_space<vmem>>, vector<16x4xf32>
    %c0_3 = arith.constant 0 : index
    %c0_4 = arith.constant 0 : index
    %2 = vector.load %arg4[%c0_3, %c0_4] : memref<4x16xf32, #tpu.memory_space<vmem>>, vector<4x16xf32>
    %c0_5 = arith.constant 0 : index
    %c0_6 = arith.constant 0 : index
    %3 = vector.load %arg5[%c0_5, %c0_6] : memref<1x16xf32, #tpu.memory_space<vmem>>, vector<1x16xf32>
    %cst = arith.constant dense<0.000000e+00> : vector<16x16xf32>
    %4 = tpu.matmul %1, %2, %cst {dimension_numbers = #tpu.dot_dimension_numbers<[1], [0], [0], [1], [0, 0, 1, 1], [], []>} : vector<16x4xf32>, vector<4x16xf32>, vector<16x16xf32> -> vector<16x16xf32>
    %5 = arith.truncf %4 : vector<16x16xf32> to vector<16x16xbf16>
    %cst_7 = arith.constant dense<0.000000e+00> : vector<16x16xf32>
    %6 = tpu.matmul %0, %5, %cst_7 {dimension_numbers = #tpu.dot_dimension_numbers<[1], [0], [0], [1], [0, 0, 1, 1], [], []>} : vector<16x16xbf16>, vector<16x16xbf16>, vector<16x16xf32> -> vector<16x16xf32>
    %7 = vector.broadcast %3 : vector<1x16xf32> to vector<16x16xf32>
    %8 = arith.addf %6, %7 : vector<16x16xf32>
    %c0_8 = arith.constant 0 : index
    %c0_9 = arith.constant 0 : index
    %9 = vector.load %arg6[%c0_8, %c0_9] : memref<1x16xf32, #tpu.memory_space<vmem>>, vector<1x16xf32>
    %c0_10 = arith.constant 0 : index
    %c0_11 = arith.constant 0 : index
    %10 = vector.load %arg7[%c0_10, %c0_11] : memref<1x16xf32, #tpu.memory_space<vmem>>, vector<1x16xf32>
    %11 = tpu.iota {dimensions = array<i32: 1>} : vector<16x16xi32>
    %c8_i32 = arith.constant 8 : i32
    %12 = vector.broadcast %c8_i32 : i32 to vector<16x16xi32>
    %13 = arith.cmpi slt, %11, %12 : vector<16x16xi32>
    %cst_12 = arith.constant dense<0.000000e+00> : vector<16xf32>
    %14 = vector.multi_reduction <add>, %8, %cst_12 [0] : vector<16x16xf32> to vector<16xf32>
    %15 = vector.shape_cast %14 : vector<16xf32> to vector<1x16xf32>
    %cst_13 = arith.constant 1.600000e+01 : f32
    %16 = vector.broadcast %cst_13 : f32 to vector<1x16xf32>
    %17 = arith.divf %15, %16 : vector<1x16xf32>
    %18 = vector.broadcast %17 : vector<1x16xf32> to vector<16x16xf32>
    %19 = arith.subf %8, %18 : vector<16x16xf32>
    %20 = arith.mulf %19, %19 : vector<16x16xf32>
    %cst_14 = arith.constant dense<0.000000e+00> : vector<16xf32>
    %21 = vector.multi_reduction <add>, %20, %cst_14 [0] : vector<16x16xf32> to vector<16xf32>
    %22 = vector.shape_cast %21 : vector<16xf32> to vector<1x16xf32>
    %cst_15 = arith.constant 1.600000e+01 : f32
    %23 = vector.broadcast %cst_15 : f32 to vector<1x16xf32>
    %24 = arith.divf %22, %23 : vector<1x16xf32>
    %cst_16 = arith.constant 9.99999974E-6 : f32
    %25 = vector.broadcast %cst_16 : f32 to vector<1x16xf32>
    %26 = arith.addf %24, %25 : vector<1x16xf32>
    %27 = math.rsqrt %26 : vector<1x16xf32>
    %28 = vector.broadcast %27 : vector<1x16xf32> to vector<16x16xf32>
    %29 = arith.mulf %19, %28 : vector<16x16xf32>
    %30 = vector.broadcast %9 : vector<1x16xf32> to vector<16x16xf32>
    %31 = arith.mulf %29, %30 : vector<16x16xf32>
    %32 = vector.broadcast %10 : vector<1x16xf32> to vector<16x16xf32>
    %33 = arith.addf %31, %32 : vector<16x16xf32>
    %cst_17 = arith.constant 0.000000e+00 : f32
    %34 = vector.broadcast %cst_17 : f32 to vector<16x16xf32>
    %35 = arith.maximumf %33, %34 : vector<16x16xf32>
    %cst_18 = arith.constant 0.000000e+00 : f32
    %36 = vector.broadcast %cst_18 : f32 to vector<16x16xf32>
    %37 = arith.maximumf %8, %36 : vector<16x16xf32>
    %cst_19 = arith.constant dense<0.000000e+00> : vector<16xf32>
    %38 = vector.multi_reduction <add>, %37, %cst_19 [0] : vector<16x16xf32> to vector<16xf32>
    %39 = vector.shape_cast %38 : vector<16xf32> to vector<1x16xf32>
    %cst_20 = arith.constant 1.600000e+01 : f32
    %40 = vector.broadcast %cst_20 : f32 to vector<1x16xf32>
    %41 = arith.divf %39, %40 : vector<1x16xf32>
    %42 = vector.broadcast %41 : vector<1x16xf32> to vector<16x16xf32>
    %43 = arith.subf %37, %42 : vector<16x16xf32>
    %44 = arith.mulf %43, %43 : vector<16x16xf32>
    %cst_21 = arith.constant dense<0.000000e+00> : vector<16xf32>
    %45 = vector.multi_reduction <add>, %44, %cst_21 [0] : vector<16x16xf32> to vector<16xf32>
    %46 = vector.shape_cast %45 : vector<16xf32> to vector<1x16xf32>
    %cst_22 = arith.constant 1.600000e+01 : f32
    %47 = vector.broadcast %cst_22 : f32 to vector<1x16xf32>
    %48 = arith.divf %46, %47 : vector<1x16xf32>
    %cst_23 = arith.constant 9.99999974E-6 : f32
    %49 = vector.broadcast %cst_23 : f32 to vector<1x16xf32>
    %50 = arith.addf %48, %49 : vector<1x16xf32>
    %51 = math.rsqrt %50 : vector<1x16xf32>
    %52 = vector.broadcast %51 : vector<1x16xf32> to vector<16x16xf32>
    %53 = arith.mulf %43, %52 : vector<16x16xf32>
    %54 = vector.broadcast %9 : vector<1x16xf32> to vector<16x16xf32>
    %55 = arith.mulf %53, %54 : vector<16x16xf32>
    %56 = vector.broadcast %10 : vector<1x16xf32> to vector<16x16xf32>
    %57 = arith.addf %55, %56 : vector<16x16xf32>
    %58 = arith.select %13, %35, %57 : vector<16x16xi1>, vector<16x16xf32>
    %c0_24 = arith.constant 0 : index
    %c0_25 = arith.constant 0 : index
    %59 = vector.load %arg8[%c0_24, %c0_25] : memref<16x32xf32, #tpu.memory_space<vmem>>, vector<16x32xf32>
    %c0_26 = arith.constant 0 : index
    %c0_27 = arith.constant 0 : index
    %60 = vector.load %arg9[%c0_26, %c0_27] : memref<1x32xf32, #tpu.memory_space<vmem>>, vector<1x32xf32>
    %cst_28 = arith.constant dense<0.000000e+00> : vector<16x32xf32>
    %61 = tpu.matmul %58, %59, %cst_28 {dimension_numbers = #tpu.dot_dimension_numbers<[1], [0], [0], [1], [0, 0, 1, 1], [], []>} : vector<16x16xf32>, vector<16x32xf32>, vector<16x32xf32> -> vector<16x32xf32>
    %62 = arith.truncf %61 : vector<16x32xf32> to vector<16x32xbf16>
    %cst_29 = arith.constant dense<0.000000e+00> : vector<16x32xf32>
    %63 = tpu.matmul %0, %62, %cst_29 {dimension_numbers = #tpu.dot_dimension_numbers<[1], [0], [0], [1], [0, 0, 1, 1], [], []>} : vector<16x16xbf16>, vector<16x32xbf16>, vector<16x32xf32> -> vector<16x32xf32>
    %64 = vector.broadcast %60 : vector<1x32xf32> to vector<16x32xf32>
    %65 = arith.addf %63, %64 : vector<16x32xf32>
    %c0_30 = arith.constant 0 : index
    %c0_31 = arith.constant 0 : index
    %66 = vector.load %arg10[%c0_30, %c0_31] : memref<1x32xf32, #tpu.memory_space<vmem>>, vector<1x32xf32>
    %c0_32 = arith.constant 0 : index
    %c0_33 = arith.constant 0 : index
    %67 = vector.load %arg11[%c0_32, %c0_33] : memref<1x32xf32, #tpu.memory_space<vmem>>, vector<1x32xf32>
    %68 = tpu.iota {dimensions = array<i32: 1>} : vector<16x32xi32>
    %c16_i32 = arith.constant 16 : i32
    %69 = vector.broadcast %c16_i32 : i32 to vector<16x32xi32>
    %70 = arith.cmpi slt, %68, %69 : vector<16x32xi32>
    %cst_34 = arith.constant dense<0.000000e+00> : vector<32xf32>
    %71 = vector.multi_reduction <add>, %65, %cst_34 [0] : vector<16x32xf32> to vector<32xf32>
    %72 = vector.shape_cast %71 : vector<32xf32> to vector<1x32xf32>
    %cst_35 = arith.constant 1.600000e+01 : f32
    %73 = vector.broadcast %cst_35 : f32 to vector<1x32xf32>
    %74 = arith.divf %72, %73 : vector<1x32xf32>
    %75 = vector.broadcast %74 : vector<1x32xf32> to vector<16x32xf32>
    %76 = arith.subf %65, %75 : vector<16x32xf32>
    %77 = arith.mulf %76, %76 : vector<16x32xf32>
    %cst_36 = arith.constant dense<0.000000e+00> : vector<32xf32>
    %78 = vector.multi_reduction <add>, %77, %cst_36 [0] : vector<16x32xf32> to vector<32xf32>
    %79 = vector.shape_cast %78 : vector<32xf32> to vector<1x32xf32>
    %cst_37 = arith.constant 1.600000e+01 : f32
    %80 = vector.broadcast %cst_37 : f32 to vector<1x32xf32>
    %81 = arith.divf %79, %80 : vector<1x32xf32>
    %cst_38 = arith.constant 9.99999974E-6 : f32
    %82 = vector.broadcast %cst_38 : f32 to vector<1x32xf32>
    %83 = arith.addf %81, %82 : vector<1x32xf32>
    %84 = math.rsqrt %83 : vector<1x32xf32>
    %85 = vector.broadcast %84 : vector<1x32xf32> to vector<16x32xf32>
    %86 = arith.mulf %76, %85 : vector<16x32xf32>
    %87 = vector.broadcast %66 : vector<1x32xf32> to vector<16x32xf32>
    %88 = arith.mulf %86, %87 : vector<16x32xf32>
    %89 = vector.broadcast %67 : vector<1x32xf32> to vector<16x32xf32>
    %90 = arith.addf %88, %89 : vector<16x32xf32>
    %cst_39 = arith.constant 0.000000e+00 : f32
    %91 = vector.broadcast %cst_39 : f32 to vector<16x32xf32>
    %92 = arith.maximumf %90, %91 : vector<16x32xf32>
    %cst_40 = arith.constant 0.000000e+00 : f32
    %93 = vector.broadcast %cst_40 : f32 to vector<16x32xf32>
    %94 = arith.maximumf %65, %93 : vector<16x32xf32>
    %cst_41 = arith.constant dense<0.000000e+00> : vector<32xf32>
    %95 = vector.multi_reduction <add>, %94, %cst_41 [0] : vector<16x32xf32> to vector<32xf32>
    %96 = vector.shape_cast %95 : vector<32xf32> to vector<1x32xf32>
    %cst_42 = arith.constant 1.600000e+01 : f32
    %97 = vector.broadcast %cst_42 : f32 to vector<1x32xf32>
    %98 = arith.divf %96, %97 : vector<1x32xf32>
    %99 = vector.broadcast %98 : vector<1x32xf32> to vector<16x32xf32>
    %100 = arith.subf %94, %99 : vector<16x32xf32>
    %101 = arith.mulf %100, %100 : vector<16x32xf32>
    %cst_43 = arith.constant dense<0.000000e+00> : vector<32xf32>
    %102 = vector.multi_reduction <add>, %101, %cst_43 [0] : vector<16x32xf32> to vector<32xf32>
    %103 = vector.shape_cast %102 : vector<32xf32> to vector<1x32xf32>
    %cst_44 = arith.constant 1.600000e+01 : f32
    %104 = vector.broadcast %cst_44 : f32 to vector<1x32xf32>
    %105 = arith.divf %103, %104 : vector<1x32xf32>
    %cst_45 = arith.constant 9.99999974E-6 : f32
    %106 = vector.broadcast %cst_45 : f32 to vector<1x32xf32>
    %107 = arith.addf %105, %106 : vector<1x32xf32>
    %108 = math.rsqrt %107 : vector<1x32xf32>
    %109 = vector.broadcast %108 : vector<1x32xf32> to vector<16x32xf32>
    %110 = arith.mulf %100, %109 : vector<16x32xf32>
    %111 = vector.broadcast %66 : vector<1x32xf32> to vector<16x32xf32>
    %112 = arith.mulf %110, %111 : vector<16x32xf32>
    %113 = vector.broadcast %67 : vector<1x32xf32> to vector<16x32xf32>
    %114 = arith.addf %112, %113 : vector<16x32xf32>
    %115 = arith.select %70, %92, %114 : vector<16x32xi1>, vector<16x32xf32>
    %c0_46 = arith.constant 0 : index
    %c0_47 = arith.constant 0 : index
    %116 = vector.load %arg12[%c0_46, %c0_47] : memref<32x16xf32, #tpu.memory_space<vmem>>, vector<32x16xf32>
    %c0_48 = arith.constant 0 : index
    %c0_49 = arith.constant 0 : index
    %117 = vector.load %arg13[%c0_48, %c0_49] : memref<1x16xf32, #tpu.memory_space<vmem>>, vector<1x16xf32>
    %cst_50 = arith.constant dense<0.000000e+00> : vector<16x16xf32>
    %118 = tpu.matmul %115, %116, %cst_50 {dimension_numbers = #tpu.dot_dimension_numbers<[1], [0], [0], [1], [0, 0, 1, 1], [], []>} : vector<16x32xf32>, vector<32x16xf32>, vector<16x16xf32> -> vector<16x16xf32>
    %119 = arith.truncf %118 : vector<16x16xf32> to vector<16x16xbf16>
    %cst_51 = arith.constant dense<0.000000e+00> : vector<16x16xf32>
    %120 = tpu.matmul %0, %119, %cst_51 {dimension_numbers = #tpu.dot_dimension_numbers<[1], [0], [0], [1], [0, 0, 1, 1], [], []>} : vector<16x16xbf16>, vector<16x16xbf16>, vector<16x16xf32> -> vector<16x16xf32>
    %121 = vector.broadcast %117 : vector<1x16xf32> to vector<16x16xf32>
    %122 = arith.addf %120, %121 : vector<16x16xf32>
    %123 = vector.extract_strided_slice %122 {offsets = [0, 0], sizes = [16, 8], strides = [1, 1]} : vector<16x16xf32> to vector<16x8xf32>
    %124 = vector.extract_strided_slice %122 {offsets = [0, 8], sizes = [16, 8], strides = [1, 1]} : vector<16x16xf32> to vector<16x8xf32>
    %cst_52 = arith.constant 1.000000e+01 : f32
    %125 = vector.broadcast %cst_52 : f32 to vector<16x8xf32>
    %126 = arith.minimumf %124, %125 : vector<16x8xf32>
    %c0_53 = arith.constant 0 : index
    %c0_54 = arith.constant 0 : index
    %127 = vector.load %arg3[%c0_53, %c0_54] : memref<16x8xf32, #tpu.memory_space<vmem>>, vector<16x8xf32>
    %128 = math.exp %126 : vector<16x8xf32>
    %129 = arith.mulf %127, %128 : vector<16x8xf32>
    %130 = arith.addf %123, %129 : vector<16x8xf32>
    %c0_55 = arith.constant 0 : index
    %c0_56 = arith.constant 0 : index
    %131 = vector.load %arg15[%c0_55, %c0_56] : memref<16x8xf32, #tpu.memory_space<vmem>>, vector<16x8xf32>
    tpu.vector_store %arg15[%c0_55, %c0_56], %130 {strides = array<i32>} : memref<16x8xf32, #tpu.memory_space<vmem>>, vector<16x8xf32>,
    %c0_57 = arith.constant 0 : index
    %c0_58 = arith.constant 0 : index
    %132 = vector.load %arg16[%c0_57, %c0_58] : memref<16x8xf32, #tpu.memory_space<vmem>>, vector<16x8xf32>
    tpu.vector_store %arg16[%c0_57, %c0_58], %126 {strides = array<i32>} : memref<16x8xf32, #tpu.memory_space<vmem>>, vector<16x8xf32>,
    %c0_59 = arith.constant 0 : index
    %c0_60 = arith.constant 0 : index
    %133 = vector.load %arg2[%c0_59, %c0_60] : memref<2x128xi32, #tpu.memory_space<vmem>>, vector<2x128xi32>
    %134 = tpu.iota {dimensions = array<i32: 0>} : vector<16x128xi32>
    %135 = vector.extract_strided_slice %133 {offsets = [0, 0], sizes = [1, 128], strides = [1, 1]} : vector<2x128xi32> to vector<1x128xi32>
    %136 = vector.broadcast %135 : vector<1x128xi32> to vector<16x128xi32>
    %137 = arith.cmpi eq, %134, %136 : vector<16x128xi32>
    %138 = arith.extui %137 : vector<16x128xi1> to vector<16x128xi32>
    %139 = arith.sitofp %138 : vector<16x128xi32> to vector<16x128xf32>
    %140 = vector.extract_strided_slice %133 {offsets = [1, 0], sizes = [1, 128], strides = [1, 1]} : vector<2x128xi32> to vector<1x128xi32>
    %141 = vector.broadcast %140 : vector<1x128xi32> to vector<16x128xi32>
    %142 = arith.cmpi eq, %134, %141 : vector<16x128xi32>
    %143 = arith.extui %142 : vector<16x128xi1> to vector<16x128xi32>
    %144 = arith.sitofp %143 : vector<16x128xi32> to vector<16x128xf32>
    %cst_61 = arith.constant dense<0.000000e+00> : vector<16x16xf32>
    %145 = tpu.matmul %130, %130, %cst_61 {dimension_numbers = #tpu.dot_dimension_numbers<[1], [1], [0], [0], [0, 0, 1, 0], [], []>} : vector<16x8xf32>, vector<16x8xf32>, vector<16x16xf32> -> vector<16x16xf32>
    %cst_62 = arith.constant dense<0.000000e+00> : vector<16x128xf32>
    %146 = tpu.matmul %145, %144, %cst_62 {dimension_numbers = #tpu.dot_dimension_numbers<[1], [0], [0], [1], [0, 0, 1, 1], [], []>} : vector<16x16xf32>, vector<16x128xf32>, vector<16x128xf32> -> vector<16x128xf32>
    %147 = arith.mulf %139, %146 : vector<16x128xf32>
    %cst_63 = arith.constant dense<0.000000e+00> : vector<128xf32>
    %148 = vector.multi_reduction <add>, %147, %cst_63 [0] : vector<16x128xf32> to vector<128xf32>
    %149 = vector.shape_cast %148 : vector<128xf32> to vector<1x128xf32>
    %150 = arith.negf %149 : vector<1x128xf32>
    %151 = math.exp %150 : vector<1x128xf32>
    %cst_64 = arith.constant 1.000000e+00 : f32
    %152 = vector.broadcast %cst_64 : f32 to vector<1x128xf32>
    %153 = arith.addf %152, %151 : vector<1x128xf32>
    %154 = arith.divf %152, %153 : vector<1x128xf32>
    %c0_65 = arith.constant 0 : index
    %c0_66 = arith.constant 0 : index
    %155 = vector.load %arg14[%c0_65, %c0_66] : memref<1x128xf32, #tpu.memory_space<vmem>>, vector<1x128xf32>
    tpu.vector_store %arg14[%c0_65, %c0_66], %154 {strides = array<i32>} : memref<1x128xf32, #tpu.memory_space<vmem>>, vector<1x128xf32>,
    return
  }
}

</mosaic_0001>

<llo_original>
// kernel: graph_vae_v3_forward.1
$region0: #{graph_vae_v3_forward.1}
  #allocation0 [shape = 'u32[]', space=smem, size = 0x4, offset = 0x4, fixed_abs, tag = 'smem constant byte address 0x4 - core index']
  #allocation1 [shape = 'u32[144,128]{1,0:T(1,128)}', space=vmem, size = 0x12000, scoped, tag = 'internal scratch']
  %s0 = inlined_call_operand.vmem [shape: bf16[16,16], index: 0, kind: input, shape index: {}]
  %s1 = inlined_call_operand.vmem [shape: f32[16,4], index: 1, kind: input, shape index: {}]
  %s2 = inlined_call_operand.vmem [shape: s32[2,128], index: 2, kind: input, shape index: {}]
  %s3 = inlined_call_operand.vmem [shape: f32[16,8], index: 3, kind: input, shape index: {}]
  %s4 = inlined_call_operand.vmem [shape: f32[4,16], index: 4, kind: input, shape index: {}]
  %s5 = inlined_call_operand.vmem [shape: f32[1,16], index: 5, kind: input, shape index: {}]
  %s6 = inlined_call_operand.vmem [shape: f32[1,16], index: 6, kind: input, shape index: {}]
  %s7 = inlined_call_operand.vmem [shape: f32[1,16], index: 7, kind: input, shape index: {}]
  %s8 = inlined_call_operand.vmem [shape: f32[16,32], index: 8, kind: input, shape index: {}]
  %s9 = inlined_call_operand.vmem [shape: f32[1,32], index: 9, kind: input, shape index: {}]
  %s10 = inlined_call_operand.vmem [shape: f32[1,32], index: 10, kind: input, shape index: {}]
  %s11 = inlined_call_operand.vmem [shape: f32[1,32], index: 11, kind: input, shape index: {}]
  %s12 = inlined_call_operand.vmem [shape: f32[32,16], index: 12, kind: input, shape index: {}]
  %s13 = inlined_call_operand.vmem [shape: f32[1,16], index: 13, kind: input, shape index: {}]
  %s14 = inlined_call_operand.vmem [shape: f32[1,128], index: 14, kind: output, shape index: {0}]
  %s15 = inlined_call_operand.vmem [shape: f32[16,8], index: 15, kind: output, shape index: {1}]
  %s16 = inlined_call_operand.vmem [shape: f32[16,8], index: 16, kind: output, shape index: {2}]
  %17 = xla_tuple %s14, %s15, %s16
  %s18 = sld [smem:[#allocation0]]
  $region82: #{graph_vae_v3_forward.1} parent=0
    _
  %s20 = ssub.s32 1, %s18
  %s21 = scalar_select 0, %s20, %s18
  // Predicated region
  $region2: #{graph_vae_v3_forward.1} parent=0 // pred_check
    _
  $region3: #{graph_vae_v3_forward.1} parent=0 // pred_check_branch
    %23 = sbr.rel (0) target = $region5
  $region4: #{graph_vae_v3_forward.1} parent=0 // pred_region
    _
  $region5: #{graph_vae_v3_forward.1} parent=0 // pred_fallthru
    _
  // Predicated region
  $region6: #{graph_vae_v3_forward.1} parent=0 // pred_check
    _
  $region7: #{graph_vae_v3_forward.1} parent=0 // pred_check_branch
    %25 = sbr.rel (0) target = $region9
  $region8: #{graph_vae_v3_forward.1} parent=0 // pred_region
    _
  $region9: #{graph_vae_v3_forward.1} parent=0 // pred_fallthru
    _
  // Predicated region
  $region10: #{graph_vae_v3_forward.1} parent=0 // pred_check
    _
  $region11: #{graph_vae_v3_forward.1} parent=0 // pred_check_branch
    %27 = sbr.rel (0) target = $region13
  $region12: #{graph_vae_v3_forward.1} parent=0 // pred_region
    _
  $region13: #{graph_vae_v3_forward.1} parent=0 // pred_fallthru
    _
  // Predicated region
  $region14: #{graph_vae_v3_forward.1} parent=0 // pred_check
    _
  $region15: #{graph_vae_v3_forward.1} parent=0 // pred_check_branch
    %29 = sbr.rel (0) target = $region17
  $region16: #{graph_vae_v3_forward.1} parent=0 // pred_region
    _
  $region17: #{graph_vae_v3_forward.1} parent=0 // pred_fallthru
    _
  // Predicated region
  $region18: #{graph_vae_v3_forward.1} parent=0 // pred_check
    _
  $region19: #{graph_vae_v3_forward.1} parent=0 // pred_check_branch
    %31 = sbr.rel (0) target = $region21
  $region20: #{graph_vae_v3_forward.1} parent=0 // pred_region
    _
  $region21: #{graph_vae_v3_forward.1} parent=0 // pred_fallthru
    _
  // Predicated region
  $region22: #{graph_vae_v3_forward.1} parent=0 // pred_check
    _
  $region23: #{graph_vae_v3_forward.1} parent=0 // pred_check_branch
    %33 = sbr.rel (0) target = $region25
  $region24: #{graph_vae_v3_forward.1} parent=0 // pred_region
    _
  $region25: #{graph_vae_v3_forward.1} parent=0 // pred_fallthru
    _
  // Predicated region
  $region26: #{graph_vae_v3_forward.1} parent=0 // pred_check
    _
  $region27: #{graph_vae_v3_forward.1} parent=0 // pred_check_branch
    %35 = sbr.rel (0) target = $region29
  $region28: #{graph_vae_v3_forward.1} parent=0 // pred_region
    _
  $region29: #{graph_vae_v3_forward.1} parent=0 // pred_fallthru
    _
  // Predicated region
  $region30: #{graph_vae_v3_forward.1} parent=0 // pred_check
    _
  $region31: #{graph_vae_v3_forward.1} parent=0 // pred_check_branch
    %37 = sbr.rel (0) target = $region33
  $region32: #{graph_vae_v3_forward.1} parent=0 // pred_region
    _
  $region33: #{graph_vae_v3_forward.1} parent=0 // pred_fallthru
    _
  // Predicated region
  $region34: #{graph_vae_v3_forward.1} parent=0 // pred_check
    _
  $region35: #{graph_vae_v3_forward.1} parent=0 // pred_check_branch
    %39 = sbr.rel (0) target = $region37
  $region36: #{graph_vae_v3_forward.1} parent=0 // pred_region
    _
  $region37: #{graph_vae_v3_forward.1} parent=0 // pred_fallthru
    _
  // Predicated region
  $region38: #{graph_vae_v3_forward.1} parent=0 // pred_check
    _
  $region39: #{graph_vae_v3_forward.1} parent=0 // pred_check_branch
    %41 = sbr.rel (0) target = $region41
  $region40: #{graph_vae_v3_forward.1} parent=0 // pred_region
    _
  $region41: #{graph_vae_v3_forward.1} parent=0 // pred_fallthru
    _
  // Predicated region
  $region42: #{graph_vae_v3_forward.1} parent=0 // pred_check
    _
  $region43: #{graph_vae_v3_forward.1} parent=0 // pred_check_branch
    %43 = sbr.rel (0) target = $region45
  $region44: #{graph_vae_v3_forward.1} parent=0 // pred_region
    _
  $region45: #{graph_vae_v3_forward.1} parent=0 // pred_fallthru
    _
  // Predicated region
  $region46: #{graph_vae_v3_forward.1} parent=0 // pred_check
    _
  $region47: #{graph_vae_v3_forward.1} parent=0 // pred_check_branch
    %45 = sbr.rel (0) target = $region49
  $region48: #{graph_vae_v3_forward.1} parent=0 // pred_region
    _
  $region49: #{graph_vae_v3_forward.1} parent=0 // pred_fallthru
    _
  // Predicated region
  $region50: #{graph_vae_v3_forward.1} parent=0 // pred_check
    _
  $region51: #{graph_vae_v3_forward.1} parent=0 // pred_check_branch
    %47 = sbr.rel (0) target = $region53
  $region52: #{graph_vae_v3_forward.1} parent=0 // pred_region
    _
  $region53: #{graph_vae_v3_forward.1} parent=0 // pred_fallthru
    _
  // Predicated region
  $region54: #{graph_vae_v3_forward.1} parent=0 // pred_check
    _
  $region55: #{graph_vae_v3_forward.1} parent=0 // pred_check_branch
    %49 = sbr.rel (0) target = $region57
  $region56: #{graph_vae_v3_forward.1} parent=0 // pred_region
    _
  $region57: #{graph_vae_v3_forward.1} parent=0 // pred_fallthru
    _
  %v51 = vld [vmem:[%s0] sm:$0xf]
  %v52 = vld [vmem:[%s0 + $0x4] sm:$0xf]
  %v53 = vld [vmem:[%s1] sm:$0xff]
  %v54 = vld [vmem:[%s1 + $0x8] sm:$0xff]
  %v55 = vld [vmem:[%s4] sm:$0xf]
  %v56 = vld [vmem:[%s5] sm:$0x1]
  %vm57 = vcmask 31744
  %v59 = vsel %vm57, %v53, 0
  %v62 = vsel %vm57, %v54, 0
  %vm64 = vcmask 1043456
  %v66 = vsel %vm64, %v55, 0
  %68 = vmatprep.subr.mxu0 0.0
  %69 = vmatpush1.msra.mxu0 0.0
  %70 = vmatprep.subr.mxu0 0.0
  %71 = vmatpush1.msra.mxu0 0.0
  %72 = vmatprep.subr.mxu0 0.0
  %73 = vmatpush1.msra.mxu0 0.0
  %74 = vmatprep.subr.mxu0 0.0
  %75 = vmatpush1.msra.mxu0 0.0
  %76 = vmatprep.subr.mxu0 0.0
  %77 = vmatpush1.msra.mxu0 0.0
  %78 = vmatprep.subr.mxu0 0.0
  %79 = vmatpush1.msra.mxu0 0.0
  %80 = vmatprep.subr.mxu0 0.0
  %81 = vmatpush1.msra.mxu0 0.0
  %82 = vmatprep.subr.mxu0 0.0
  %83 = vmatpush1.msra.mxu0 0.0
  %84 = vmatprep.subr.mxu0 0.0
  %85 = vmatpush1.msra.mxu0 0.0
  %86 = vmatprep.subr.mxu0 0.0
  %87 = vmatpush1.msra.mxu0 0.0
  %88 = vmatprep.subr.mxu0 0.0
  %89 = vmatpush1.msra.mxu0 0.0
  %90 = vmatprep.subr.mxu0 0.0
  %91 = vmatpush1.msra.mxu0 0.0
  %92 = vmatprep.subr.mxu0 0.0
  %93 = vmatpush1.msra.mxu0 0.0
  %94 = vmatprep.subr.mxu0 0.0
  %95 = vmatpush1.msra.mxu0 0.0
  %96 = vmatprep.subr.mxu0 0.0
  %97 = vmatpush1.msra.mxu0 0.0
  %98 = vmatprep.subr.mxu0 0.0
  %99 = vmatpush1.msra.mxu0 %v66
  %100 = vmatprep.subr.mxu0 0.0
  %101 = vmatpush2.msra.mxu0 0.0
  %102 = vmatprep.subr.mxu0 0.0
  %103 = vmatpush2.msra.mxu0 0.0
  %104 = vmatprep.subr.mxu0 0.0
  %105 = vmatpush2.msra.mxu0 0.0
  %106 = vmatprep.subr.mxu0 0.0
  %107 = vmatpush2.msra.mxu0 0.0
  %108 = vmatprep.subr.mxu0 0.0
  %109 = vmatpush2.msra.mxu0 0.0
  %110 = vmatprep.subr.mxu0 0.0
  %111 = vmatpush2.msra.mxu0 0.0
  %112 = vmatprep.subr.mxu0 0.0
  %113 = vmatpush2.msra.mxu0 0.0
  %114 = vmatprep.subr.mxu0 0.0
  %115 = vmatpush2.msra.mxu0 0.0
  %116 = vmatprep.subr.mxu0 0.0
  %117 = vmatpush2.msra.mxu0 0.0
  %118 = vmatprep.subr.mxu0 0.0
  %119 = vmatpush2.msra.mxu0 0.0
  %120 = vmatprep.subr.mxu0 0.0
  %121 = vmatpush2.msra.mxu0 0.0
  %122 = vmatprep.subr.mxu0 0.0
  %123 = vmatpush2.msra.mxu0 0.0
  %124 = vmatprep.subr.mxu0 0.0
  %125 = vmatpush2.msra.mxu0 0.0
  %126 = vmatprep.subr.mxu0 0.0
  %127 = vmatpush2.msra.mxu0 0.0
  %128 = vmatprep.subr.mxu0 0.0
  %129 = vmatpush2.msra.mxu0 0.0
  %130 = vmatprep.subr.mxu0 0.0
  %131 = vmatpush2.msra.mxu0 0.0
  %132 = vmatprep.mubr.f32.mxu0 0.0
  %133 = vmatmul.mubr.f32.gmra.mxu0 %v59
  %v134 = vpop.f32.mrf.mxu0
  %v135 = vadd.f32 0.0, %v134
  %v136 = vpop.f32.mrf.mxu0
  %137 = vmatprep.mubr.f32.mxu0 0.0
  %138 = vmatmul.mubr.f32.gmra.mxu0 %v62
  %v139 = vpop.f32.mrf.mxu0
  %v140 = vadd.f32 0.0, %v139
  %v141 = vpop.f32.mrf.mxu0
  %142 = vdwg.mxu0
  %v143 = vpack.c.bf16 %v140, %v135
  %v145 = vlaneseq
  %v146 = vshrl.u32 %v145, 7
  %v147 = vsub.s32 0, %v146
  %v148 = vrot.slane %v56, %v147
  %v152 = vunpack.c.l.b16 %v51
  %v153 = vunpack.c.l.b16 %v52
  %v154 = vpack.c.b16 %v153, %v152
  %vm155 = vcmask 130048
  %v157 = vsel %vm155, %v154, 0
  %159 = vmatprep.subr.bf16.mxu0 0
  %160 = vmatpush1.bf16.msra.mxu0 0
  %161 = vmatprep.subr.bf16.mxu0 0
  %162 = vmatpush1.bf16.msra.mxu0 0
  %163 = vmatprep.subr.bf16.mxu0 0
  %164 = vmatpush1.bf16.msra.mxu0 0
  %165 = vmatprep.subr.bf16.mxu0 0
  %166 = vmatpush1.bf16.msra.mxu0 0
  %167 = vmatprep.subr.bf16.mxu0 0
  %168 = vmatpush1.bf16.msra.mxu0 0
  %169 = vmatprep.subr.bf16.mxu0 0
  %170 = vmatpush1.bf16.msra.mxu0 0
  %171 = vmatprep.subr.bf16.mxu0 0
  %172 = vmatpush1.bf16.msra.mxu0 0
  %173 = vmatprep.subr.bf16.mxu0 0
  %174 = vmatpush1.bf16.msra.mxu0 %v143
  %175 = vmatprep.subr.bf16.mxu0 0
  %176 = vmatpush2.bf16.msra.mxu0 0
  %177 = vmatprep.subr.bf16.mxu0 0
  %178 = vmatpush2.bf16.msra.mxu0 0
  %179 = vmatprep.subr.bf16.mxu0 0
  %180 = vmatpush2.bf16.msra.mxu0 0
  %181 = vmatprep.subr.bf16.mxu0 0
  %182 = vmatpush2.bf16.msra.mxu0 0
  %183 = vmatprep.subr.bf16.mxu0 0
  %184 = vmatpush2.bf16.msra.mxu0 0
  %185 = vmatprep.subr.bf16.mxu0 0
  %186 = vmatpush2.bf16.msra.mxu0 0
  %187 = vmatprep.subr.bf16.mxu0 0
  %188 = vmatpush2.bf16.msra.mxu0 0
  %189 = vmatprep.subr.bf16.mxu0 0
  %190 = vmatpush2.bf16.msra.mxu0 0
  %191 = vmatprep.mubr.bf16.mxu0 0
  %192 = vmatmul.mubr.bf16.gmra.mxu0 %v157
  %v193 = vpop.f32.mrf.mxu0
  %v194 = vadd.f32 %v148, %v193
  %v195 = vpop.f32.mrf.mxu0
  %v196 = vpop.f32.mrf.mxu0
  %v197 = vadd.f32 %v148, %v196
  %v198 = vpop.f32.mrf.mxu0
  %199 = vdwg.mxu0
  %v200 = vld [vmem:[%s6] sm:$0x1]
  %v201 = vld [vmem:[%s7] sm:$0x1]
  %v202 = vlaneseq
  %v203 = vand.u32 %v202, 127
  %vm204 = vcmp.lt.s32.totalorder %v203, 8
  %v205 = vsel %vm155, %v194, 0.0
  %v206 = vsel %vm155, %v197, 0.0
  %v207 = vadd.f32 %v205, %v206
  %v208 = vrot.slane %v207, 4
  %v209 = vadd.f32 %v207, %v208
  %v210 = vrot.slane %v209, 2
  %v211 = vadd.f32 %v209, %v210
  %v212 = vrot.slane %v211, 1
  %v213 = vadd.f32 %v211, %v212
  %v214 = vrcp.pop 16.0
  %v215 = vmul.f32 %v213, %v214
  %v216 = vsub.f32 %v194, %v215
  %v217 = vsub.f32 %v197, %v215
  %v218 = vmul.f32 %v216, %v216
  %v219 = vmul.f32 %v217, %v217
  %v220 = vsel %vm155, %v218, 0.0
  %v221 = vsel %vm155, %v219, 0.0
  %v222 = vadd.f32 %v220, %v221
  %v223 = vrot.slane %v222, 4
  %v224 = vadd.f32 %v222, %v223
  %v225 = vrot.slane %v224, 2
  %v226 = vadd.f32 %v224, %v225
  %v227 = vrot.slane %v226, 1
  %v228 = vadd.f32 %v226, %v227
  %v229 = vmul.f32 %v228, %v214
  %v230 = vadd.f32 %v229, 1e-05
  %v231 = vrsqrt.pop %v230
  %v232 = vmul.f32 %v216, %v231
  %v233 = vmul.f32 %v217, %v231
  %v235 = vlaneseq
  %v236 = vshrl.u32 %v235, 7
  %v237 = vsub.s32 0, %v236
  %v238 = vrot.slane %v200, %v237
  %v240 = vmul.f32 %v232, %v238
  %v241 = vmul.f32 %v233, %v238
  %v243 = vlaneseq
  %v244 = vshrl.u32 %v243, 7
  %v245 = vsub.s32 0, %v244
  %v246 = vrot.slane %v201, %v245
  %v248 = vadd.f32 %v240, %v246
  %v249 = vadd.f32 %v241, %v246
  %v250 = vmax.f32 %v248, 0.0
  %v251 = vmax.f32 %v249, 0.0
  %v252 = vmax.f32 %v194, 0.0
  %v253 = vmax.f32 %v197, 0.0
  %v254 = vsel %vm155, %v252, 0.0
  %v255 = vsel %vm155, %v253, 0.0
  %v256 = vadd.f32 %v254, %v255
  %v257 = vrot.slane %v256, 4
  %v258 = vadd.f32 %v256, %v257
  %v259 = vrot.slane %v258, 2
  %v260 = vadd.f32 %v258, %v259
  %v261 = vrot.slane %v260, 1
  %v262 = vadd.f32 %v260, %v261
  %v263 = vmul.f32 %v262, %v214
  %v264 = vsub.f32 %v252, %v263
  %v265 = vsub.f32 %v253, %v263
  %v266 = vmul.f32 %v264, %v264
  %v267 = vmul.f32 %v265, %v265
  %v268 = vsel %vm155, %v266, 0.0
  %v269 = vsel %vm155, %v267, 0.0
  %v270 = vadd.f32 %v268, %v269
  %v271 = vrot.slane %v270, 4
  %v272 = vadd.f32 %v270, %v271
  %v273 = vrot.slane %v272, 2
  %v274 = vadd.f32 %v272, %v273
  %v275 = vrot.slane %v274, 1
  %v276 = vadd.f32 %v274, %v275
  %v277 = vmul.f32 %v276, %v214
  %v278 = vadd.f32 %v277, 1e-05
  %v279 = vrsqrt.pop %v278
  %v280 = vmul.f32 %v264, %v279
  %v281 = vmul.f32 %v265, %v279
  %v282 = vmul.f32 %v280, %v238
  %v283 = vmul.f32 %v281, %v238
  %v284 = vadd.f32 %v282, %v246
  %v285 = vadd.f32 %v283, %v246
  %v286 = vsel %vm204, %v250, %v284
  %v287 = vsel %vm204, %v251, %v285
  %v288 = vld [vmem:[%s8] sm:$0xff]
  %v289 = vld [vmem:[%s8 + $0x8] sm:$0xff]
  %v290 = vld [vmem:[%s9] sm:$0x1]
  %v292 = vsel %vm155, %v286, 0
  %v295 = vsel %vm155, %v287, 0
  %297 = vmatprep.subr.mxu0 0.0
  %298 = vmatpush1.msra.mxu0 0.0
  %299 = vmatprep.subr.mxu0 0.0
  %300 = vmatpush1.msra.mxu0 0.0
  %301 = vmatprep.subr.mxu0 0.0
  %302 = vmatpush1.msra.mxu0 0.0
  %303 = vmatprep.subr.mxu0 0.0
  %304 = vmatpush1.msra.mxu0 0.0
  %305 = vmatprep.subr.mxu0 0.0
  %306 = vmatpush1.msra.mxu0 0.0
  %307 = vmatprep.subr.mxu0 0.0
  %308 = vmatpush1.msra.mxu0 0.0
  %309 = vmatprep.subr.mxu0 0.0
  %310 = vmatpush1.msra.mxu0 0.0
  %311 = vmatprep.subr.mxu0 0.0
  %312 = vmatpush1.msra.mxu0 0.0
  %313 = vmatprep.subr.mxu0 0.0
  %314 = vmatpush1.msra.mxu0 0.0
  %315 = vmatprep.subr.mxu0 0.0
  %316 = vmatpush1.msra.mxu0 0.0
  %317 = vmatprep.subr.mxu0 0.0
  %318 = vmatpush1.msra.mxu0 0.0
  %319 = vmatprep.subr.mxu0 0.0
  %320 = vmatpush1.msra.mxu0 0.0
  %321 = vmatprep.subr.mxu0 0.0
  %322 = vmatpush1.msra.mxu0 0.0
  %323 = vmatprep.subr.mxu0 0.0
  %324 = vmatpush1.msra.mxu0 0.0
  %325 = vmatprep.subr.mxu0 0.0
  %326 = vmatpush1.msra.mxu0 %v289
  %327 = vmatprep.subr.mxu0 0.0
  %328 = vmatpush1.msra.mxu0 %v288
  %329 = vmatprep.subr.mxu0 0.0
  %330 = vmatpush2.msra.mxu0 0.0
  %331 = vmatprep.subr.mxu0 0.0
  %332 = vmatpush2.msra.mxu0 0.0
  %333 = vmatprep.subr.mxu0 0.0
  %334 = vmatpush2.msra.mxu0 0.0
  %335 = vmatprep.subr.mxu0 0.0
  %336 = vmatpush2.msra.mxu0 0.0
  %337 = vmatprep.subr.mxu0 0.0
  %338 = vmatpush2.msra.mxu0 0.0
  %339 = vmatprep.subr.mxu0 0.0
  %340 = vmatpush2.msra.mxu0 0.0
  %341 = vmatprep.subr.mxu0 0.0
  %342 = vmatpush2.msra.mxu0 0.0
  %343 = vmatprep.subr.mxu0 0.0
  %344 = vmatpush2.msra.mxu0 0.0
  %345 = vmatprep.subr.mxu0 0.0
  %346 = vmatpush2.msra.mxu0 0.0
  %347 = vmatprep.subr.mxu0 0.0
  %348 = vmatpush2.msra.mxu0 0.0
  %349 = vmatprep.subr.mxu0 0.0
  %350 = vmatpush2.msra.mxu0 0.0
  %351 = vmatprep.subr.mxu0 0.0
  %352 = vmatpush2.msra.mxu0 0.0
  %353 = vmatprep.subr.mxu0 0.0
  %354 = vmatpush2.msra.mxu0 0.0
  %355 = vmatprep.subr.mxu0 0.0
  %356 = vmatpush2.msra.mxu0 0.0
  %357 = vmatprep.subr.mxu0 0.0
  %358 = vmatpush2.msra.mxu0 0.0
  %359 = vmatprep.subr.mxu0 0.0
  %360 = vmatpush2.msra.mxu0 0.0
  %361 = vmatprep.mubr.f32.mxu0 0.0
  %362 = vmatmul.mubr.f32.gmra.mxu0 %v292
  %v363 = vpop.f32.mrf.mxu0
  %v364 = vadd.f32 0.0, %v363
  %v365 = vpop.f32.mrf.mxu0
  %366 = vmatprep.mubr.f32.mxu0 0.0
  %367 = vmatmul.mubr.f32.gmra.mxu0 %v295
  %v368 = vpop.f32.mrf.mxu0
  %v369 = vadd.f32 0.0, %v368
  %v370 = vpop.f32.mrf.mxu0
  %371 = vdwg.mxu0
  %v372 = vpack.c.bf16 %v369, %v364
  %v374 = vlaneseq
  %v375 = vshrl.u32 %v374, 7
  %v376 = vsub.s32 0, %v375
  %v377 = vrot.slane %v290, %v376
  %379 = vmatprep.subr.bf16.mxu0 0
  %380 = vmatpush1.bf16.msra.mxu0 0
  %381 = vmatprep.subr.bf16.mxu0 0
  %382 = vmatpush1.bf16.msra.mxu0 0
  %383 = vmatprep.subr.bf16.mxu0 0
  %384 = vmatpush1.bf16.msra.mxu0 0
  %385 = vmatprep.subr.bf16.mxu0 0
  %386 = vmatpush1.bf16.msra.mxu0 0
  %387 = vmatprep.subr.bf16.mxu0 0
  %388 = vmatpush1.bf16.msra.mxu0 0
  %389 = vmatprep.subr.bf16.mxu0 0
  %390 = vmatpush1.bf16.msra.mxu0 0
  %391 = vmatprep.subr.bf16.mxu0 0
  %392 = vmatpush1.bf16.msra.mxu0 0
  %393 = vmatprep.subr.bf16.mxu0 0
  %394 = vmatpush1.bf16.msra.mxu0 %v372
  %395 = vmatprep.subr.bf16.mxu0 0
  %396 = vmatpush2.bf16.msra.mxu0 0
  %397 = vmatprep.subr.bf16.mxu0 0
  %398 = vmatpush2.bf16.msra.mxu0 0
  %399 = vmatprep.subr.bf16.mxu0 0
  %400 = vmatpush2.bf16.msra.mxu0 0
  %401 = vmatprep.subr.bf16.mxu0 0
  %402 = vmatpush2.bf16.msra.mxu0 0
  %403 = vmatprep.subr.bf16.mxu0 0
  %404 = vmatpush2.bf16.msra.mxu0 0
  %405 = vmatprep.subr.bf16.mxu0 0
  %406 = vmatpush2.bf16.msra.mxu0 0
  %407 = vmatprep.subr.bf16.mxu0 0
  %408 = vmatpush2.bf16.msra.mxu0 0
  %409 = vmatprep.subr.bf16.mxu0 0
  %410 = vmatpush2.bf16.msra.mxu0 0
  %411 = vmatprep.mubr.bf16.mxu0 0
  %412 = vmatmul.mubr.bf16.gmra.mxu0 %v157
  %v413 = vpop.f32.mrf.mxu0
  %v414 = vadd.f32 %v377, %v413
  %v415 = vpop.f32.mrf.mxu0
  %v416 = vpop.f32.mrf.mxu0
  %v417 = vadd.f32 %v377, %v416
  %v418 = vpop.f32.mrf.mxu0
  %419 = vdwg.mxu0
  %v420 = vld [vmem:[%s10] sm:$0x1]
  %v421 = vld [vmem:[%s11] sm:$0x1]
  %vm422 = vcmp.lt.s32.totalorder %v203, 16
  %vm423 = vcmask 261120
  %v424 = vsel %vm423, %v414, 0.0
  %v425 = vsel %vm423, %v417, 0.0
  %v426 = vadd.f32 %v424, %v425
  %v427 = vrot.slane %v426, 4
  %v428 = vadd.f32 %v426, %v427
  %v429 = vrot.slane %v428, 2
  %v430 = vadd.f32 %v428, %v429
  %v431 = vrot.slane %v430, 1
  %v432 = vadd.f32 %v430, %v431
  %v433 = vmul.f32 %v432, %v214
  %v434 = vsub.f32 %v414, %v433
  %v435 = vsub.f32 %v417, %v433
  %v436 = vmul.f32 %v434, %v434
  %v437 = vmul.f32 %v435, %v435
  %v438 = vsel %vm423, %v436, 0.0
  %v439 = vsel %vm423, %v437, 0.0
  %v440 = vadd.f32 %v438, %v439
  %v441 = vrot.slane %v440, 4
  %v442 = vadd.f32 %v440, %v441
  %v443 = vrot.slane %v442, 2
  %v444 = vadd.f32 %v442, %v443
  %v445 = vrot.slane %v444, 1
  %v446 = vadd.f32 %v444, %v445
  %v447 = vmul.f32 %v446, %v214
  %v448 = vadd.f32 %v447, 1e-05
  %v449 = vrsqrt.pop %v448
  %v450 = vmul.f32 %v434, %v449
  %v451 = vmul.f32 %v435, %v449
  %v453 = vlaneseq
  %v454 = vshrl.u32 %v453, 7
  %v455 = vsub.s32 0, %v454
  %v456 = vrot.slane %v420, %v455
  %v458 = vmul.f32 %v450, %v456
  %v459 = vmul.f32 %v451, %v456
  %v461 = vlaneseq
  %v462 = vshrl.u32 %v461, 7
  %v463 = vsub.s32 0, %v462
  %v464 = vrot.slane %v421, %v463
  %v466 = vadd.f32 %v458, %v464
  %v467 = vadd.f32 %v459, %v464
  %v468 = vmax.f32 %v466, 0.0
  %v469 = vmax.f32 %v467, 0.0
  %v470 = vmax.f32 %v414, 0.0
  %v471 = vmax.f32 %v417, 0.0
  %v472 = vsel %vm423, %v470, 0.0
  %v473 = vsel %vm423, %v471, 0.0
  %v474 = vadd.f32 %v472, %v473
  %v475 = vrot.slane %v474, 4
  %v476 = vadd.f32 %v474, %v475
  %v477 = vrot.slane %v476, 2
  %v478 = vadd.f32 %v476, %v477
  %v479 = vrot.slane %v478, 1
  %v480 = vadd.f32 %v478, %v479
  %v481 = vmul.f32 %v480, %v214
  %v482 = vsub.f32 %v470, %v481
  %v483 = vsub.f32 %v471, %v481
  %v484 = vmul.f32 %v482, %v482
  %v485 = vmul.f32 %v483, %v483
  %v486 = vsel %vm423, %v484, 0.0
  %v487 = vsel %vm423, %v485, 0.0
  %v488 = vadd.f32 %v486, %v487
  %v489 = vrot.slane %v488, 4
  %v490 = vadd.f32 %v488, %v489
  %v491 = vrot.slane %v490, 2
  %v492 = vadd.f32 %v490, %v491
  %v493 = vrot.slane %v492, 1
  %v494 = vadd.f32 %v492, %v493
  %v495 = vmul.f32 %v494, %v214
  %v496 = vadd.f32 %v495, 1e-05
  %v497 = vrsqrt.pop %v496
  %v498 = vmul.f32 %v482, %v497
  %v499 = vmul.f32 %v483, %v497
  %v500 = vmul.f32 %v498, %v456
  %v501 = vmul.f32 %v499, %v456
  %v502 = vadd.f32 %v500, %v464
  %v503 = vadd.f32 %v501, %v464
  %v504 = vsel %vm422, %v468, %v502
  %v505 = vsel %vm422, %v469, %v503
  %v506 = vld [vmem:[%s12] sm:$0xff]
  %v507 = vld [vmem:[%s12 + $0x8] sm:$0xff]
  %v508 = vld [vmem:[%s12 + $0x10] sm:$0xff]
  %v509 = vld [vmem:[%s12 + $0x18] sm:$0xff]
  %v510 = vld [vmem:[%s13] sm:$0x1]
  %v512 = vsel %vm423, %v504, 0
  %v515 = vsel %vm423, %v505, 0
  %517 = vmatprep.subr.mxu0 0.0
  %518 = vmatpush1.msra.mxu0 0.0
  %519 = vmatprep.subr.mxu0 0.0
  %520 = vmatpush1.msra.mxu0 0.0
  %521 = vmatprep.subr.mxu0 0.0
  %522 = vmatpush1.msra.mxu0 0.0
  %523 = vmatprep.subr.mxu0 0.0
  %524 = vmatpush1.msra.mxu0 0.0
  %525 = vmatprep.subr.mxu0 0.0
  %526 = vmatpush1.msra.mxu0 0.0
  %527 = vmatprep.subr.mxu0 0.0
  %528 = vmatpush1.msra.mxu0 0.0
  %529 = vmatprep.subr.mxu0 0.0
  %530 = vmatpush1.msra.mxu0 0.0
  %531 = vmatprep.subr.mxu0 0.0
  %532 = vmatpush1.msra.mxu0 0.0
  %533 = vmatprep.subr.mxu0 0.0
  %534 = vmatpush1.msra.mxu0 0.0
  %535 = vmatprep.subr.mxu0 0.0
  %536 = vmatpush1.msra.mxu0 0.0
  %537 = vmatprep.subr.mxu0 0.0
  %538 = vmatpush1.msra.mxu0 0.0
  %539 = vmatprep.subr.mxu0 0.0
  %540 = vmatpush1.msra.mxu0 0.0
  %541 = vmatprep.subr.mxu0 0.0
  %542 = vmatpush1.msra.mxu0 %v509
  %543 = vmatprep.subr.mxu0 0.0
  %544 = vmatpush1.msra.mxu0 %v508
  %545 = vmatprep.subr.mxu0 0.0
  %546 = vmatpush1.msra.mxu0 %v507
  %547 = vmatprep.subr.mxu0 0.0
  %548 = vmatpush1.msra.mxu0 %v506
  %549 = vmatprep.subr.mxu0 0.0
  %550 = vmatpush2.msra.mxu0 0.0
  %551 = vmatprep.subr.mxu0 0.0
  %552 = vmatpush2.msra.mxu0 0.0
  %553 = vmatprep.subr.mxu0 0.0
  %554 = vmatpush2.msra.mxu0 0.0
  %555 = vmatprep.subr.mxu0 0.0
  %556 = vmatpush2.msra.mxu0 0.0
  %557 = vmatprep.subr.mxu0 0.0
  %558 = vmatpush2.msra.mxu0 0.0
  %559 = vmatprep.subr.mxu0 0.0
  %560 = vmatpush2.msra.mxu0 0.0
  %561 = vmatprep.subr.mxu0 0.0
  %562 = vmatpush2.msra.mxu0 0.0
  %563 = vmatprep.subr.mxu0 0.0
  %564 = vmatpush2.msra.mxu0 0.0
  %565 = vmatprep.subr.mxu0 0.0
  %566 = vmatpush2.msra.mxu0 0.0
  %567 = vmatprep.subr.mxu0 0.0
  %568 = vmatpush2.msra.mxu0 0.0
  %569 = vmatprep.subr.mxu0 0.0
  %570 = vmatpush2.msra.mxu0 0.0
  %571 = vmatprep.subr.mxu0 0.0
  %572 = vmatpush2.msra.mxu0 0.0
  %573 = vmatprep.subr.mxu0 0.0
  %574 = vmatpush2.msra.mxu0 0.0
  %575 = vmatprep.subr.mxu0 0.0
  %576 = vmatpush2.msra.mxu0 0.0
  %577 = vmatprep.subr.mxu0 0.0
  %578 = vmatpush2.msra.mxu0 0.0
  %579 = vmatprep.subr.mxu0 0.0
  %580 = vmatpush2.msra.mxu0 0.0
  %581 = vmatprep.mubr.f32.mxu0 0.0
  %582 = vmatmul.mubr.f32.gmra.mxu0 %v512
  %v583 = vpop.f32.mrf.mxu0
  %v584 = vadd.f32 0.0, %v583
  %v585 = vpop.f32.mrf.mxu0
  %586 = vmatprep.mubr.f32.mxu0 0.0
  %587 = vmatmul.mubr.f32.gmra.mxu0 %v515
  %v588 = vpop.f32.mrf.mxu0
  %v589 = vadd.f32 0.0, %v588
  %v590 = vpop.f32.mrf.mxu0
  %591 = vdwg.mxu0
  %v592 = vpack.c.bf16 %v589, %v584
  %v594 = vlaneseq
  %v595 = vshrl.u32 %v594, 7
  %v596 = vsub.s32 0, %v595
  %v597 = vrot.slane %v510, %v596
  %599 = vmatprep.subr.bf16.mxu0 0
  %600 = vmatpush1.bf16.msra.mxu0 0
  %601 = vmatprep.subr.bf16.mxu0 0
  %602 = vmatpush1.bf16.msra.mxu0 0
  %603 = vmatprep.subr.bf16.mxu0 0
  %604 = vmatpush1.bf16.msra.mxu0 0
  %605 = vmatprep.subr.bf16.mxu0 0
  %606 = vmatpush1.bf16.msra.mxu0 0
  %607 = vmatprep.subr.bf16.mxu0 0
  %608 = vmatpush1.bf16.msra.mxu0 0
  %609 = vmatprep.subr.bf16.mxu0 0
  %610 = vmatpush1.bf16.msra.mxu0 0
  %611 = vmatprep.subr.bf16.mxu0 0
  %612 = vmatpush1.bf16.msra.mxu0 0
  %613 = vmatprep.subr.bf16.mxu0 0
  %614 = vmatpush1.bf16.msra.mxu0 %v592
  %615 = vmatprep.subr.bf16.mxu0 0
  %616 = vmatpush2.bf16.msra.mxu0 0
  %617 = vmatprep.subr.bf16.mxu0 0
  %618 = vmatpush2.bf16.msra.mxu0 0
  %619 = vmatprep.subr.bf16.mxu0 0
  %620 = vmatpush2.bf16.msra.mxu0 0
  %621 = vmatprep.subr.bf16.mxu0 0
  %622 = vmatpush2.bf16.msra.mxu0 0
  %623 = vmatprep.subr.bf16.mxu0 0
  %624 = vmatpush2.bf16.msra.mxu0 0
  %625 = vmatprep.subr.bf16.mxu0 0
  %626 = vmatpush2.bf16.msra.mxu0 0
  %627 = vmatprep.subr.bf16.mxu0 0
  %628 = vmatpush2.bf16.msra.mxu0 0
  %629 = vmatprep.subr.bf16.mxu0 0
  %630 = vmatpush2.bf16.msra.mxu0 0
  %631 = vmatprep.mubr.bf16.mxu0 0
  %632 = vmatmul.mubr.bf16.gmra.mxu0 %v157
  %v633 = vpop.f32.mrf.mxu0
  %v634 = vadd.f32 %v597, %v633
  %v635 = vpop.f32.mrf.mxu0
  %v636 = vpop.f32.mrf.mxu0
  %v637 = vadd.f32 %v597, %v636
  %v638 = vpop.f32.mrf.mxu0
  %639 = vdwg.mxu0
  %v640 = vmin.f32 %v634, 10.0
  %v641 = vmin.f32 %v637, 10.0
  %v642 = vld [vmem:[%s3] sm:$0xff]
  %v643 = vld [vmem:[%s3 + $0x8] sm:$0xff]
  %v644 = vmul.f32 %v640, 1.442695
  %v645 = vpow.pop %v644
  %v646 = vmul.f32 %v641, 1.442695
  %v647 = vpow.pop %v646
  %650 = vrot.lane.b32.xlu0 %v645, 120
  %v651 = vpop.permute.xlu0 %650
  %652 = vrot.lane.b32.xlu0 %v647, 120
  %v653 = vpop.permute.xlu0 %652
  %v656 = vmul.f32 %v642, %v651
  %v657 = vmul.f32 %v643, %v653
  %v658 = vadd.f32 %v634, %v656
  %v659 = vadd.f32 %v637, %v657
  %vm660 = vcmask 64512
  %661 = vst.msk [vmem:[%s15] sm:$0xff] %vm660, %v658
  %662 = vst.msk [vmem:[%s15 + $0x8] sm:$0xff] %vm660, %v659
  %665 = vrot.lane.b32.xlu0 %v640, 120
  %v666 = vpop.permute.xlu0 %665
  %667 = vrot.lane.b32.xlu0 %v641, 120
  %v668 = vpop.permute.xlu0 %667
  %671 = vst.msk [vmem:[%s16] sm:$0xff] %vm660, %v666
  %672 = vst.msk [vmem:[%s16 + $0x8] sm:$0xff] %vm660, %v668
  %v673 = vld [vmem:[%s2] sm:$0x3]
  %v674 = vlaneseq
  %v675 = vshrl.u32 %v674, 7
  %v676 = vadd.s32 %v675, 8
  %v677 = vlaneseq
  %v678 = vshrl.u32 %v677, 7
  %v679 = vsub.s32 0, %v678
  %v680 = vrot.slane %v673, %v679
  %vm681 = vcmp.eq.s32.totalorder %v675, %v680
  %vm682 = vcmp.eq.s32.totalorder %v676, %v680
  %v683 = vsel %vm681, 1, 0
  %v684 = vsel %vm682, 1, 0
  %v685 = vcvt.s32.f32 %v683
  %v686 = vcvt.s32.f32 %v684
  %v687 = vlaneseq
  %v688 = vshrl.u32 %v687, 7
  %v689 = vsub.s32 1, %v688
  %v690 = vrot.slane %v673, %v689
  %vm691 = vcmp.eq.s32.totalorder %v675, %v690
  %vm692 = vcmp.eq.s32.totalorder %v676, %v690
  %v693 = vsel %vm691, 1, 0
  %v694 = vsel %vm692, 1, 0
  %v695 = vcvt.s32.f32 %v693
  %v696 = vcvt.s32.f32 %v694
  %v698 = vsel %vm660, %v658, 0
  %v701 = vsel %vm660, %v659, 0
  %703 = vmatprep.subr.mxu0 0.0
  %704 = vmatpush1.xpose.msra.mxu0 0.0
  %705 = vmatprep.subr.mxu0 0.0
  %706 = vmatpush1.xpose.msra.mxu0 0.0
  %707 = vmatprep.subr.mxu0 0.0
  %708 = vmatpush1.xpose.msra.mxu0 0.0
  %709 = vmatprep.subr.mxu0 0.0
  %710 = vmatpush1.xpose.msra.mxu0 0.0
  %711 = vmatprep.subr.mxu0 0.0
  %712 = vmatpush1.xpose.msra.mxu0 0.0
  %713 = vmatprep.subr.mxu0 0.0
  %714 = vmatpush1.xpose.msra.mxu0 0.0
  %715 = vmatprep.subr.mxu0 0.0
  %716 = vmatpush1.xpose.msra.mxu0 0.0
  %717 = vmatprep.subr.mxu0 0.0
  %718 = vmatpush1.xpose.msra.mxu0 0.0
  %719 = vmatprep.subr.mxu0 0.0
  %720 = vmatpush1.xpose.msra.mxu0 0.0
  %721 = vmatprep.subr.mxu0 0.0
  %722 = vmatpush1.xpose.msra.mxu0 0.0
  %723 = vmatprep.subr.mxu0 0.0
  %724 = vmatpush1.xpose.msra.mxu0 0.0
  %725 = vmatprep.subr.mxu0 0.0
  %726 = vmatpush1.xpose.msra.mxu0 0.0
  %727 = vmatprep.subr.mxu0 0.0
  %728 = vmatpush1.xpose.msra.mxu0 0.0
  %729 = vmatprep.subr.mxu0 0.0
  %730 = vmatpush1.xpose.msra.mxu0 0.0
  %731 = vmatprep.subr.mxu0 0.0
  %732 = vmatpush1.xpose.msra.mxu0 %v701
  %733 = vmatprep.subr.mxu0 0.0
  %734 = vmatpush1.xpose.msra.mxu0 %v698
  %735 = vmatprep.subr.mxu0 0.0
  %736 = vmatpush2.xpose.msra.mxu0 0.0
  %737 = vmatprep.subr.mxu0 0.0
  %738 = vmatpush2.xpose.msra.mxu0 0.0
  %739 = vmatprep.subr.mxu0 0.0
  %740 = vmatpush2.xpose.msra.mxu0 0.0
  %741 = vmatprep.subr.mxu0 0.0
  %742 = vmatpush2.xpose.msra.mxu0 0.0
  %743 = vmatprep.subr.mxu0 0.0
  %744 = vmatpush2.xpose.msra.mxu0 0.0
  %745 = vmatprep.subr.mxu0 0.0
  %746 = vmatpush2.xpose.msra.mxu0 0.0
  %747 = vmatprep.subr.mxu0 0.0
  %748 = vmatpush2.xpose.msra.mxu0 0.0
  %749 = vmatprep.subr.mxu0 0.0
  %750 = vmatpush2.xpose.msra.mxu0 0.0
  %751 = vmatprep.subr.mxu0 0.0
  %752 = vmatpush2.xpose.msra.mxu0 0.0
  %753 = vmatprep.subr.mxu0 0.0
  %754 = vmatpush2.xpose.msra.mxu0 0.0
  %755 = vmatprep.subr.mxu0 0.0
  %756 = vmatpush2.xpose.msra.mxu0 0.0
  %757 = vmatprep.subr.mxu0 0.0
  %758 = vmatpush2.xpose.msra.mxu0 0.0
  %759 = vmatprep.subr.mxu0 0.0
  %760 = vmatpush2.xpose.msra.mxu0 0.0
  %761 = vmatprep.subr.mxu0 0.0
  %762 = vmatpush2.xpose.msra.mxu0 0.0
  %763 = vmatprep.subr.mxu0 0.0
  %764 = vmatpush2.xpose.msra.mxu0 0.0
  %765 = vmatprep.subr.mxu0 0.0
  %766 = vmatpush2.xpose.msra.mxu0 0.0
  %767 = vmatprep.mubr.f32.mxu0 0.0
  %768 = vmatmul.mubr.f32.gmra.mxu0 %v698
  %v769 = vpop.f32.mrf.mxu0
  %v770 = vadd.f32 0.0, %v769
  %v771 = vpop.f32.mrf.mxu0
  %772 = vmatprep.mubr.f32.mxu0 0.0
  %773 = vmatmul.mubr.f32.gmra.mxu0 %v701
  %v774 = vpop.f32.mrf.mxu0
  %v775 = vadd.f32 0.0, %v774
  %v776 = vpop.f32.mrf.mxu0
  %777 = vdwg.mxu0
  %v779 = vsel %vm155, %v770, 0
  %v782 = vsel %vm155, %v775, 0
  %784 = vmatprep.subr.mxu0 0.0
  %785 = vmatpush1.msra.mxu0 0.0
  %786 = vmatprep.subr.mxu0 0.0
  %787 = vmatpush1.msra.mxu0 0.0
  %788 = vmatprep.subr.mxu0 0.0
  %789 = vmatpush1.msra.mxu0 0.0
  %790 = vmatprep.subr.mxu0 0.0
  %791 = vmatpush1.msra.mxu0 0.0
  %792 = vmatprep.subr.mxu0 0.0
  %793 = vmatpush1.msra.mxu0 0.0
  %794 = vmatprep.subr.mxu0 0.0
  %795 = vmatpush1.msra.mxu0 0.0
  %796 = vmatprep.subr.mxu0 0.0
  %797 = vmatpush1.msra.mxu0 0.0
  %798 = vmatprep.subr.mxu0 0.0
  %799 = vmatpush1.msra.mxu0 0.0
  %800 = vmatprep.subr.mxu0 0.0
  %801 = vmatpush1.msra.mxu0 0.0
  %802 = vmatprep.subr.mxu0 0.0
  %803 = vmatpush1.msra.mxu0 0.0
  %804 = vmatprep.subr.mxu0 0.0
  %805 = vmatpush1.msra.mxu0 0.0
  %806 = vmatprep.subr.mxu0 0.0
  %807 = vmatpush1.msra.mxu0 0.0
  %808 = vmatprep.subr.mxu0 0.0
  %809 = vmatpush1.msra.mxu0 0.0
  %810 = vmatprep.subr.mxu0 0.0
  %811 = vmatpush1.msra.mxu0 0.0
  %812 = vmatprep.subr.mxu0 0.0
  %813 = vmatpush1.msra.mxu0 %v696
  %814 = vmatprep.subr.mxu0 0.0
  %815 = vmatpush1.msra.mxu0 %v695
  %816 = vmatprep.subr.mxu0 0.0
  %817 = vmatpush2.msra.mxu0 0.0
  %818 = vmatprep.subr.mxu0 0.0
  %819 = vmatpush2.msra.mxu0 0.0
  %820 = vmatprep.subr.mxu0 0.0
  %821 = vmatpush2.msra.mxu0 0.0
  %822 = vmatprep.subr.mxu0 0.0
  %823 = vmatpush2.msra.mxu0 0.0
  %824 = vmatprep.subr.mxu0 0.0
  %825 = vmatpush2.msra.mxu0 0.0
  %826 = vmatprep.subr.mxu0 0.0
  %827 = vmatpush2.msra.mxu0 0.0
  %828 = vmatprep.subr.mxu0 0.0
  %829 = vmatpush2.msra.mxu0 0.0
  %830 = vmatprep.subr.mxu0 0.0
  %831 = vmatpush2.msra.mxu0 0.0
  %832 = vmatprep.subr.mxu0 0.0
  %833 = vmatpush2.msra.mxu0 0.0
  %834 = vmatprep.subr.mxu0 0.0
  %835 = vmatpush2.msra.mxu0 0.0
  %836 = vmatprep.subr.mxu0 0.0
  %837 = vmatpush2.msra.mxu0 0.0
  %838 = vmatprep.subr.mxu0 0.0
  %839 = vmatpush2.msra.mxu0 0.0
  %840 = vmatprep.subr.mxu0 0.0
  %841 = vmatpush2.msra.mxu0 0.0
  %842 = vmatprep.subr.mxu0 0.0
  %843 = vmatpush2.msra.mxu0 0.0
  %844 = vmatprep.subr.mxu0 0.0
  %845 = vmatpush2.msra.mxu0 0.0
  %846 = vmatprep.subr.mxu0 0.0
  %847 = vmatpush2.msra.mxu0 0.0
  %848 = vmatprep.mubr.f32.mxu0 0.0
  %849 = vmatmul.mubr.f32.gmra.mxu0 %v779
  %v850 = vpop.f32.mrf.mxu0
  %v851 = vadd.f32 0.0, %v850
  %v852 = vpop.f32.mrf.mxu0
  %853 = vmatprep.mubr.f32.mxu0 0.0
  %854 = vmatmul.mubr.f32.gmra.mxu0 %v782
  %v855 = vpop.f32.mrf.mxu0
  %v856 = vadd.f32 0.0, %v855
  %v857 = vpop.f32.mrf.mxu0
  %858 = vdwg.mxu0
  %v859 = vmul.f32 %v685, %v851
  %v860 = vmul.f32 %v686, %v856
  %v861 = vadd.f32 %v859, %v860
  %v862 = vrot.slane %v861, 4
  %v863 = vadd.f32 %v861, %v862
  %v864 = vrot.slane %v863, 2
  %v865 = vadd.f32 %v863, %v864
  %v866 = vrot.slane %v865, 1
  %v867 = vadd.f32 %v865, %v866
  %v868 = vxor.u32 %v867, 2147483648
  %v869 = vmul.f32 %v868, 1.442695
  %v870 = vpow.pop %v869
  %v871 = vadd.f32 %v870, 1.0
  %v872 = vrcp.pop %v871
  %v873 = vmul.f32 1.0, %v872
  %874 = vst [vmem:[%s14] sm:$0x1] %v873
  // Predicated region
  $region58: #{graph_vae_v3_forward.1} parent=0 // pred_check
    _
  $region59: #{graph_vae_v3_forward.1} parent=0 // pred_check_branch
    %876 = sbr.rel (0) target = $region61
  $region60: #{graph_vae_v3_forward.1} parent=0 // pred_region
    _
  $region61: #{graph_vae_v3_forward.1} parent=0 // pred_fallthru
    _
  // Predicated region
  $region62: #{graph_vae_v3_forward.1} parent=0 // pred_check
    _
  $region63: #{graph_vae_v3_forward.1} parent=0 // pred_check_branch
    %878 = sbr.rel (0) target = $region65
  $region64: #{graph_vae_v3_forward.1} parent=0 // pred_region
    _
  $region65: #{graph_vae_v3_forward.1} parent=0 // pred_fallthru
    _
  // Predicated region
  $region66: #{graph_vae_v3_forward.1} parent=0 // pred_check
    _
  $region67: #{graph_vae_v3_forward.1} parent=0 // pred_check_branch
    %880 = sbr.rel (0) target = $region69
  $region68: #{graph_vae_v3_forward.1} parent=0 // pred_region
    _
  $region69: #{graph_vae_v3_forward.1} parent=0 // pred_fallthru
    _
  // Predicated region
  $region70: #{graph_vae_v3_forward.1} parent=0 // pred_check
    _
  $region71: #{graph_vae_v3_forward.1} parent=0 // pred_check_branch
    %882 = sbr.rel (0) target = $region73
  $region72: #{graph_vae_v3_forward.1} parent=0 // pred_region
    _
  $region73: #{graph_vae_v3_forward.1} parent=0 // pred_fallthru
    _
  // Predicated region
  $region74: #{graph_vae_v3_forward.1} parent=0 // pred_check
    _
  $region75: #{graph_vae_v3_forward.1} parent=0 // pred_check_branch
    %884 = sbr.rel (0) target = $region77
  $region76: #{graph_vae_v3_forward.1} parent=0 // pred_region
    _
  $region77: #{graph_vae_v3_forward.1} parent=0 // pred_fallthru
    _
  // Predicated region
  $region78: #{graph_vae_v3_forward.1} parent=0 // pred_check
    _
  $region79: #{graph_vae_v3_forward.1} parent=0 // pred_check_branch
    %886 = sbr.rel (0) target = $region81
  $region80: #{graph_vae_v3_forward.1} parent=0 // pred_region
    _
  $region81: #{graph_vae_v3_forward.1} parent=0 // pred_fallthru
    _

</llo_original>
